<compile_context>
chip_gen: v7x
topology: tpu7x:2x2x1
jax: 0.10.0
libtpu: 0.0.40
codegen_flags: <defaults>
</compile_context>

<pallas_src>
import functools

import jax
import jax.numpy as jnp
from jax.experimental import pallas as pl
from jax.experimental.pallas import tpu as pltpu


LANE = 128
SUBLANE = 8


def _round_up(n, m):
    return ((n + m - 1) // m) * m


# ----------------------------------------------------------------------------
# Kernel: fused 4-layer MLP, (Linear+ReLU) x3 -> Linear. bf16 MXU, f32 acc.
# All layer widths are pre-padded to multiples of 128 -> every matmul and the
# final store are lane-dense (no masked vst).
# ----------------------------------------------------------------------------
def dqn_kernel(x_ref,
               w1_ref, b1_ref,
               w2_ref, b2_ref,
               w3_ref, b3_ref,
               w4_ref, b4_ref,
               o_ref):
    h = x_ref[...].astype(jnp.bfloat16)

    h = jnp.dot(h, w1_ref[...], preferred_element_type=jnp.float32) + b1_ref[...]
    h = jnp.maximum(h, 0.0).astype(jnp.bfloat16)

    h = jnp.dot(h, w2_ref[...], preferred_element_type=jnp.float32) + b2_ref[...]
    h = jnp.maximum(h, 0.0).astype(jnp.bfloat16)

    h = jnp.dot(h, w3_ref[...], preferred_element_type=jnp.float32) + b3_ref[...]
    h = jnp.maximum(h, 0.0).astype(jnp.bfloat16)

    out = jnp.dot(h, w4_ref[...], preferred_element_type=jnp.float32) + b4_ref[...]
    o_ref[...] = out.astype(o_ref.dtype)  # lane-dense (tb, 128) store


# ----------------------------------------------------------------------------
# One-time parameter preparation (hoisted out of the forward path).
# ----------------------------------------------------------------------------
def prepare_params(params):
    """Zero-pad each layer's output dim (and the next layer's matching input
    dim) to a multiple of 128, cast weights to bf16, keep biases f32.
    Call once at parameter init / update time, NOT per forward call."""
    n_actions = params[-1][0].shape[1]
    padded = []
    prev_out_pad = None
    for (w, b) in params:
        k, n = w.shape
        k_pad = k if prev_out_pad is None else prev_out_pad
        n_pad = _round_up(n, LANE)
        w_p = jnp.zeros((k_pad, n_pad), jnp.float32).at[:k, :n].set(w)
        b_p = jnp.zeros((1, n_pad), jnp.float32).at[:, :n].set(b)
        padded.append((w_p.astype(jnp.bfloat16), b_p))
        prev_out_pad = n_pad
    return tuple(padded), n_actions


# ----------------------------------------------------------------------------
# Jitted forward implementation.
# ----------------------------------------------------------------------------
@functools.partial(
    jax.jit,
    static_argnames=("tb", "n_actions", "out_dtype", "return_padded"))
def _dqn_forward_impl(x, padded_params, *, tb, n_actions, out_dtype,
                      return_padded):
    (w1, b1), (w2, b2), (w3, b3), (w4, b4) = padded_params
    batch, n_obs = x.shape
    n_out_pad = w4.shape[1]

    grid = (pl.cdiv(batch, tb),)

    x_spec = pl.BlockSpec((tb, n_obs), lambda i: (i, 0))
    out_spec = pl.BlockSpec((tb, n_out_pad), lambda i: (i, 0))

    def resident(arr):
        # Same block for every grid step -> fetched once, stays in VMEM.
        return pl.BlockSpec(arr.shape, lambda i: (0, 0))

    in_specs = [x_spec]
    args = [x]
    for (w, b) in ((w1, b1), (w2, b2), (w3, b3), (w4, b4)):
        in_specs += [resident(w), resident(b)]
        args += [w, b]

    out_padded = pl.pallas_call(
        dqn_kernel,
        out_shape=jax.ShapeDtypeStruct((batch, n_out_pad), out_dtype),
        grid=grid,
        in_specs=in_specs,
        out_specs=out_spec,
        compiler_params=pltpu.CompilerParams(
            dimension_semantics=("parallel",),
        ),
    )(*args)

    if return_padded:
        # No post-kernel slice: consumer indexes / reduces the slab itself
        # (e.g. greedy action = argmax over the first n_actions columns).
        return out_padded
    return out_padded[:, :n_actions]


def _num_tensorcores():
    """Best-effort TensorCore count (2 on v7x, 1 on v5e/v6e)."""
    try:
        return max(1, int(getattr(jax.devices()[0], "num_cores", 1)))
    except Exception:  # pragma: no cover - defensive
        return 1


def dqn_forward(x, prepared, *, tb=256, out_dtype=jnp.float32,
                return_padded=False):
    """Forward pass. `prepared` = prepare_params(params) (done once).

    tb         : batch tile; rounded to a multiple of 8 on multi-step grids.
    out_dtype  : jnp.float32 (default) or jnp.bfloat16 to halve output traffic.
    return_padded: return the lane-dense (B, 128) slab instead of slicing.
    """
    padded_params, n_actions = prepared
    batch = x.shape[0]

    # On multi-TensorCore chips, ensure >= num_cores grid steps so the
    # "parallel" batch axis spans all cores (no-op on 1-TC chips).
    n_tc = _num_tensorcores()
    if n_tc > 1 and batch >= 2 * SUBLANE:
        tb = min(tb, max(SUBLANE, _round_up(pl.cdiv(batch, n_tc), SUBLANE)))

    if batch <= tb:
        tb_eff = batch  # single full-extent block (no (8,128) constraint)
    else:
        tb_eff = max(SUBLANE, (tb // SUBLANE) * SUBLANE)  # multiple of 8

    return _dqn_forward_impl(x, padded_params, tb=tb_eff, n_actions=n_actions,
                             out_dtype=out_dtype, return_padded=return_padded)


# ----------------------------------------------------------------------------
# Reference + init helpers.
# ----------------------------------------------------------------------------
def dqn_reference(x, params):
    """Pure-JAX reference using the same bf16-weight / f32-accumulate math."""
    h = x
    for i, (w, b) in enumerate(params):
        h = jnp.dot(h.astype(jnp.bfloat16), w.astype(jnp.bfloat16),
                    preferred_element_type=jnp.float32) + b
        if i < 3:
            h = jnp.maximum(h, 0.0)
    return h


def init_linear(key, in_features, out_features):
    """Deterministic init matching nn.Linear's U(-1/sqrt(in), 1/sqrt(in)).
    Weights stored as (in, out) so the kernel does x @ W directly."""
    kw, kb = jax.random.split(key)
    bound = 1.0 / jnp.sqrt(jnp.float32(in_features))
    w = jax.random.uniform(kw, (in_features, out_features), jnp.float32,
                           minval=-bound, maxval=bound)
    b = jax.random.uniform(kb, (1, out_features), jnp.float32,
                           minval=-bound, maxval=bound)
    return w, b


if __name__ == "__main__":
    n_observations = 8
    n_actions = 4

    key = jax.random.PRNGKey(0)
    k_x1, k_x2, k1, k2, k3, k4 = jax.random.split(key, 6)

    params = (
        init_linear(k1, n_observations, 64),
        init_linear(k2, 64, 128),
        init_linear(k3, 128, 64),
        init_linear(k4, 64, n_actions),
    )

    # One-time pad + bf16 cast (hoisted out of the per-call path).
    prepared = prepare_params(params)

    # Small batch: single (or per-core) block.
    x_small = jax.random.normal(k_x1, (4, n_observations), jnp.float32)
    out_small = dqn_forward(x_small, prepared)
    jax.block_until_ready(out_small)
    ref_small = dqn_reference(x_small, params)
    assert out_small.shape == (4, n_actions)
    assert jnp.allclose(out_small, ref_small, atol=1e-3, rtol=1e-3)

    # Multi-step batch grid (exercises pipelining + resident weights).
    x_big = jax.random.normal(k_x2, (64, n_observations), jnp.float32)
    out_big = dqn_forward(x_big, prepared, tb=16)
    jax.block_until_ready(out_big)
    ref_big = dqn_reference(x_big, params)
    assert out_big.shape == (64, n_actions)
    assert jnp.allclose(out_big, ref_big, atol=1e-3, rtol=1e-3)

    # Padded-slab path (skips the post-kernel slice entirely).
    out_pad = dqn_forward(x_big, prepared, tb=16, return_padded=True)
    jax.block_until_ready(out_pad)
    assert out_pad.shape == (64, 128)
    assert jnp.allclose(out_pad[:, :n_actions], ref_big, atol=1e-3, rtol=1e-3)

    print("KERNEL_OK")
</pallas_src>

<mosaic_0001>
module attributes {stable_mosaic.version = 11 : i64} {
  func.func @dqn_kernel(%arg0: i32, %arg1: memref<4x8xf32, #tpu.memory_space<vmem>>, %arg2: memref<8x128xbf16, #tpu.memory_space<vmem>>, %arg3: memref<1x128xf32, #tpu.memory_space<vmem>>, %arg4: memref<128x128xbf16, #tpu.memory_space<vmem>>, %arg5: memref<1x128xf32, #tpu.memory_space<vmem>>, %arg6: memref<128x128xbf16, #tpu.memory_space<vmem>>, %arg7: memref<1x128xf32, #tpu.memory_space<vmem>>, %arg8: memref<128x128xbf16, #tpu.memory_space<vmem>>, %arg9: memref<1x128xf32, #tpu.memory_space<vmem>>, %arg10: memref<4x128xf32, #tpu.memory_space<vmem>>) attributes {dimension_semantics = [#tpu.dimension_semantics<parallel>], iteration_bounds = array<i64: 1>, scalar_prefetch = 0 : i64, scratch_operands = 0 : i64, tpu.core_type = #tpu.core_type<tc>, window_params = [{transform_indices = @transform_0, window_bounds = array<i64: 4, 8>}, {pipeline_mode = #tpu.pipeline_mode<synchronous>, transform_indices = @transform_1, window_bounds = array<i64: 8, 128>}, {pipeline_mode = #tpu.pipeline_mode<synchronous>, transform_indices = @transform_2, window_bounds = array<i64: 1, 128>}, {pipeline_mode = #tpu.pipeline_mode<synchronous>, transform_indices = @transform_3, window_bounds = array<i64: 128, 128>}, {pipeline_mode = #tpu.pipeline_mode<synchronous>, transform_indices = @transform_4, window_bounds = array<i64: 1, 128>}, {pipeline_mode = #tpu.pipeline_mode<synchronous>, transform_indices = @transform_5, window_bounds = array<i64: 128, 128>}, {pipeline_mode = #tpu.pipeline_mode<synchronous>, transform_indices = @transform_6, window_bounds = array<i64: 1, 128>}, {pipeline_mode = #tpu.pipeline_mode<synchronous>, transform_indices = @transform_7, window_bounds = array<i64: 128, 128>}, {pipeline_mode = #tpu.pipeline_mode<synchronous>, transform_indices = @transform_8, window_bounds = array<i64: 1, 128>}, {transform_indices = @transform_9, window_bounds = array<i64: 4, 128>}]} {
    %c0 = arith.constant 0 : index
    %c0_0 = arith.constant 0 : index
    %0 = vector.load %arg1[%c0, %c0_0] : memref<4x8xf32, #tpu.memory_space<vmem>>, vector<4x8xf32>
    %1 = arith.truncf %0 : vector<4x8xf32> to vector<4x8xbf16>
    %c0_1 = arith.constant 0 : index
    %c0_2 = arith.constant 0 : index
    %2 = vector.load %arg2[%c0_1, %c0_2] : memref<8x128xbf16, #tpu.memory_space<vmem>>, vector<8x128xbf16>
    %cst = arith.constant dense<0.000000e+00> : vector<4x128xf32>
    %3 = tpu.matmul %1, %2, %cst {dimension_numbers = #tpu.dot_dimension_numbers<[1], [0], [0], [1], [0, 0, 1, 1], [], []>} : vector<4x8xbf16>, vector<8x128xbf16>, vector<4x128xf32> -> vector<4x128xf32>
    %c0_3 = arith.constant 0 : index
    %c0_4 = arith.constant 0 : index
    %4 = vector.load %arg3[%c0_3, %c0_4] : memref<1x128xf32, #tpu.memory_space<vmem>>, vector<1x128xf32>
    %5 = vector.broadcast %4 : vector<1x128xf32> to vector<4x128xf32>
    %6 = arith.addf %3, %5 : vector<4x128xf32>
    %cst_5 = arith.constant 0.000000e+00 : f32
    %7 = vector.broadcast %cst_5 : f32 to vector<4x128xf32>
    %8 = arith.maximumf %6, %7 : vector<4x128xf32>
    %9 = arith.truncf %8 : vector<4x128xf32> to vector<4x128xbf16>
    %c0_6 = arith.constant 0 : index
    %c0_7 = arith.constant 0 : index
    %10 = vector.load %arg4[%c0_6, %c0_7] : memref<128x128xbf16, #tpu.memory_space<vmem>>, vector<128x128xbf16>
    %cst_8 = arith.constant dense<0.000000e+00> : vector<4x128xf32>
    %11 = tpu.matmul %9, %10, %cst_8 {dimension_numbers = #tpu.dot_dimension_numbers<[1], [0], [0], [1], [0, 0, 1, 1], [], []>} : vector<4x128xbf16>, vector<128x128xbf16>, vector<4x128xf32> -> vector<4x128xf32>
    %c0_9 = arith.constant 0 : index
    %c0_10 = arith.constant 0 : index
    %12 = vector.load %arg5[%c0_9, %c0_10] : memref<1x128xf32, #tpu.memory_space<vmem>>, vector<1x128xf32>
    %13 = vector.broadcast %12 : vector<1x128xf32> to vector<4x128xf32>
    %14 = arith.addf %11, %13 : vector<4x128xf32>
    %cst_11 = arith.constant 0.000000e+00 : f32
    %15 = vector.broadcast %cst_11 : f32 to vector<4x128xf32>
    %16 = arith.maximumf %14, %15 : vector<4x128xf32>
    %17 = arith.truncf %16 : vector<4x128xf32> to vector<4x128xbf16>
    %c0_12 = arith.constant 0 : index
    %c0_13 = arith.constant 0 : index
    %18 = vector.load %arg6[%c0_12, %c0_13] : memref<128x128xbf16, #tpu.memory_space<vmem>>, vector<128x128xbf16>
    %cst_14 = arith.constant dense<0.000000e+00> : vector<4x128xf32>
    %19 = tpu.matmul %17, %18, %cst_14 {dimension_numbers = #tpu.dot_dimension_numbers<[1], [0], [0], [1], [0, 0, 1, 1], [], []>} : vector<4x128xbf16>, vector<128x128xbf16>, vector<4x128xf32> -> vector<4x128xf32>
    %c0_15 = arith.constant 0 : index
    %c0_16 = arith.constant 0 : index
    %20 = vector.load %arg7[%c0_15, %c0_16] : memref<1x128xf32, #tpu.memory_space<vmem>>, vector<1x128xf32>
    %21 = vector.broadcast %20 : vector<1x128xf32> to vector<4x128xf32>
    %22 = arith.addf %19, %21 : vector<4x128xf32>
    %cst_17 = arith.constant 0.000000e+00 : f32
    %23 = vector.broadcast %cst_17 : f32 to vector<4x128xf32>
    %24 = arith.maximumf %22, %23 : vector<4x128xf32>
    %25 = arith.truncf %24 : vector<4x128xf32> to vector<4x128xbf16>
    %c0_18 = arith.constant 0 : index
    %c0_19 = arith.constant 0 : index
    %26 = vector.load %arg8[%c0_18, %c0_19] : memref<128x128xbf16, #tpu.memory_space<vmem>>, vector<128x128xbf16>
    %cst_20 = arith.constant dense<0.000000e+00> : vector<4x128xf32>
    %27 = tpu.matmul %25, %26, %cst_20 {dimension_numbers = #tpu.dot_dimension_numbers<[1], [0], [0], [1], [0, 0, 1, 1], [], []>} : vector<4x128xbf16>, vector<128x128xbf16>, vector<4x128xf32> -> vector<4x128xf32>
    %c0_21 = arith.constant 0 : index
    %c0_22 = arith.constant 0 : index
    %28 = vector.load %arg9[%c0_21, %c0_22] : memref<1x128xf32, #tpu.memory_space<vmem>>, vector<1x128xf32>
    %29 = vector.broadcast %28 : vector<1x128xf32> to vector<4x128xf32>
    %30 = arith.addf %27, %29 : vector<4x128xf32>
    %c0_23 = arith.constant 0 : index
    %c0_24 = arith.constant 0 : index
    %31 = vector.load %arg10[%c0_23, %c0_24] : memref<4x128xf32, #tpu.memory_space<vmem>>, vector<4x128xf32>
    tpu.vector_store %arg10[%c0_23, %c0_24], %30 {strides = array<i32>} : memref<4x128xf32, #tpu.memory_space<vmem>>, vector<4x128xf32>,
    return
  }
  func.func @transform_0(%arg0: i32) -> (i32, i32) {
    %c0_i32 = arith.constant 0 : i32
    %c0_i32_0 = arith.constant 0 : i32
    return %arg0, %c0_i32 : i32, i32
  }
  func.func @transform_1(%arg0: i32) -> (i32, i32) {
    %c0_i32 = arith.constant 0 : i32
    %c0_i32_0 = arith.constant 0 : i32
    %c0_i32_1 = arith.constant 0 : i32
    return %c0_i32, %c0_i32_0 : i32, i32
  }
  func.func @transform_2(%arg0: i32) -> (i32, i32) {
    %c0_i32 = arith.constant 0 : i32
    %c0_i32_0 = arith.constant 0 : i32
    %c0_i32_1 = arith.constant 0 : i32
    return %c0_i32, %c0_i32_0 : i32, i32
  }
  func.func @transform_3(%arg0: i32) -> (i32, i32) {
    %c0_i32 = arith.constant 0 : i32
    %c0_i32_0 = arith.constant 0 : i32
    %c0_i32_1 = arith.constant 0 : i32
    return %c0_i32, %c0_i32_0 : i32, i32
  }
  func.func @transform_4(%arg0: i32) -> (i32, i32) {
    %c0_i32 = arith.constant 0 : i32
    %c0_i32_0 = arith.constant 0 : i32
    %c0_i32_1 = arith.constant 0 : i32
    return %c0_i32, %c0_i32_0 : i32, i32
  }
  func.func @transform_5(%arg0: i32) -> (i32, i32) {
    %c0_i32 = arith.constant 0 : i32
    %c0_i32_0 = arith.constant 0 : i32
    %c0_i32_1 = arith.constant 0 : i32
    return %c0_i32, %c0_i32_0 : i32, i32
  }
  func.func @transform_6(%arg0: i32) -> (i32, i32) {
    %c0_i32 = arith.constant 0 : i32
    %c0_i32_0 = arith.constant 0 : i32
    %c0_i32_1 = arith.constant 0 : i32
    return %c0_i32, %c0_i32_0 : i32, i32
  }
  func.func @transform_7(%arg0: i32) -> (i32, i32) {
    %c0_i32 = arith.constant 0 : i32
    %c0_i32_0 = arith.constant 0 : i32
    %c0_i32_1 = arith.constant 0 : i32
    return %c0_i32, %c0_i32_0 : i32, i32
  }
  func.func @transform_8(%arg0: i32) -> (i32, i32) {
    %c0_i32 = arith.constant 0 : i32
    %c0_i32_0 = arith.constant 0 : i32
    %c0_i32_1 = arith.constant 0 : i32
    return %c0_i32, %c0_i32_0 : i32, i32
  }
  func.func @transform_9(%arg0: i32) -> (i32, i32) {
    %c0_i32 = arith.constant 0 : i32
    %c0_i32_0 = arith.constant 0 : i32
    return %arg0, %c0_i32 : i32, i32
  }
}

</mosaic_0001>

<llo_original>
// kernel: _dqn_forward_impl.1
$region0: #{_dqn_forward_impl.1}
  #allocation0 [shape = 'u32[]', space=smem, size = 0x4, offset = 0x4, fixed_abs, tag = 'smem constant byte address 0x4 - core index']
  #allocation1 [shape = 'u32[144,128]{1,0:T(1,128)}', space=vmem, size = 0x12000, scoped, tag = 'internal scratch']
  %s0 = inlined_call_operand.hbm [shape: f32[4,8], index: 0, kind: input, shape index: {}]
  %s1 = inlined_call_operand.hbm [shape: bf16[8,128], index: 1, kind: input, shape index: {}]
  %s2 = inlined_call_operand.vmem [shape: f32[1,128], index: 2, kind: input, shape index: {}]
  %s3 = inlined_call_operand.hbm [shape: bf16[128,128], index: 3, kind: input, shape index: {}]
  %s4 = inlined_call_operand.vmem [shape: f32[1,128], index: 4, kind: input, shape index: {}]
  %s5 = inlined_call_operand.hbm [shape: bf16[128,128], index: 5, kind: input, shape index: {}]
  %s6 = inlined_call_operand.vmem [shape: f32[1,128], index: 6, kind: input, shape index: {}]
  %s7 = inlined_call_operand.hbm [shape: bf16[128,128], index: 7, kind: input, shape index: {}]
  %s8 = inlined_call_operand.vmem [shape: f32[1,128], index: 8, kind: input, shape index: {}]
  %s9 = inlined_call_operand.hbm [shape: f32[4,128], index: 9, kind: output, shape index: {}]
  %s10 = sld [smem:[#allocation0]]
  $region66: #{_dqn_forward_impl.1} parent=0
    _
  %s12 = ssub.s32 1, %s10
  %s13 = scalar_select 0, %s12, %s10
  $region1: #{_dqn_forward_impl.1} parent=0
    #allocation2 [shape = 'u8[2048]{0}', space=vmem, size = 0x800, scoped, tag = 'input window, operand 0, single buffered']
    #allocation3 [shape = 's32[1]{0}', space=sflag, size = 0x4, scoped, tag = 'scoped memory for _dqn_forward_impl.1']
    #allocation4 [shape = 's32[1]{0}', space=sflag, size = 0x4, scoped, tag = 'scoped memory for _dqn_forward_impl.1']
    #allocation5 [shape = 'u8[2048]{0}', space=vmem, size = 0x800, scoped, tag = 'input window, operand 1, single buffered']
    #allocation6 [shape = 's32[1]{0}', space=sflag, size = 0x4, scoped, tag = 'scoped memory for _dqn_forward_impl.1']
    #allocation7 [shape = 'u8[32768]{0}', space=vmem, size = 0x8000, scoped, tag = 'input window, operand 3, single buffered']
    #allocation8 [shape = 'u8[32768]{0}', space=vmem, size = 0x8000, scoped, tag = 'input window, operand 5, single buffered']
    #allocation9 [shape = 's32[1]{0}', space=sflag, size = 0x4, scoped, tag = 'scoped memory for _dqn_forward_impl.1']
    #allocation10 [shape = 'u8[32768]{0}', space=vmem, size = 0x8000, scoped, tag = 'input window, operand 7, single buffered']
    #allocation11 [shape = 'u8[2048]{0}', space=vmem, size = 0x800, scoped, tag = 'output window, operand 0, single buffered']
    %14 = vsyncpa [#allocation3], 0
    %15 = vsyncpa [#allocation6], 0
    %16 = vsyncpa [#allocation9], 0
    %17 = vsyncpa [#allocation4], 0
    // Predicated region
    $region2: #{_dqn_forward_impl.1} parent=1 // pred_check
      _
    $region3: #{_dqn_forward_impl.1} parent=1 // pred_check_branch
      %19 = sbr.rel (0) target = $region5
    $region4: #{_dqn_forward_impl.1} parent=1 // pred_region
      %s21 = ssub.s32 64, 64
      %22 = vsyncadd [#allocation3], %s21
      %s24 = sshll.u32 [#allocation2], 4
      %s25 = int_to_ptr.vmem [resolvable:$true] %s24
      %27 = dma.hbm_to_vmem [thread:$0]  %s0, 64, %s25, [#allocation3]
    $region5: #{_dqn_forward_impl.1} parent=1 // pred_fallthru
      _
    // Predicated region
    $region6: #{_dqn_forward_impl.1} parent=1 // pred_check
      _
    $region7: #{_dqn_forward_impl.1} parent=1 // pred_check_branch
      %29 = sbr.rel (0) target = $region9
    $region8: #{_dqn_forward_impl.1} parent=1 // pred_region
      %s31 = ssub.s32 64, 64
      %32 = vsyncadd [#allocation6], %s31
      %s34 = sshll.u32 [#allocation5], 4
      %s35 = int_to_ptr.vmem [resolvable:$true] %s34
      %37 = dma.hbm_to_vmem [thread:$0]  %s1, 64, %s35, [#allocation6]
    $region9: #{_dqn_forward_impl.1} parent=1 // pred_fallthru
      _
    // Predicated region
    $region10: #{_dqn_forward_impl.1} parent=1 // pred_check
      _
    $region11: #{_dqn_forward_impl.1} parent=1 // pred_check_branch
      %39 = sbr.rel (0) target = $region13
    $region12: #{_dqn_forward_impl.1} parent=1 // pred_region
      _
    $region13: #{_dqn_forward_impl.1} parent=1 // pred_fallthru
      _
    // Predicated region
    $region14: #{_dqn_forward_impl.1} parent=1 // pred_check
      _
    $region15: #{_dqn_forward_impl.1} parent=1 // pred_check_branch
      %41 = sbr.rel (0) target = $region17
    $region16: #{_dqn_forward_impl.1} parent=1 // pred_region
      %s43 = ssub.s32 1024, 1024
      %44 = vsyncadd [#allocation6], %s43
      %s45 = sshll.u32 [#allocation7], 4
      %s46 = int_to_ptr.vmem [resolvable:$true] %s45
      %51 = dma.hbm_to_vmem [thread:$0]  %s3, 1024, %s46, [#allocation6], 64, 64, 4
    $region17: #{_dqn_forward_impl.1} parent=1 // pred_fallthru
      _
    // Predicated region
    $region18: #{_dqn_forward_impl.1} parent=1 // pred_check
      _
    $region19: #{_dqn_forward_impl.1} parent=1 // pred_check_branch
      %53 = sbr.rel (0) target = $region21
    $region20: #{_dqn_forward_impl.1} parent=1 // pred_region
      _
    $region21: #{_dqn_forward_impl.1} parent=1 // pred_fallthru
      _
    // Predicated region
    $region22: #{_dqn_forward_impl.1} parent=1 // pred_check
      _
    $region23: #{_dqn_forward_impl.1} parent=1 // pred_check_branch
      %55 = sbr.rel (0) target = $region25
    $region24: #{_dqn_forward_impl.1} parent=1 // pred_region
      %s57 = ssub.s32 1024, 1024
      %58 = vsyncadd [#allocation9], %s57
      %s59 = sshll.u32 [#allocation8], 4
      %s60 = int_to_ptr.vmem [resolvable:$true] %s59
      %65 = dma.hbm_to_vmem [thread:$0]  %s5, 1024, %s60, [#allocation9], 64, 64, 4
    $region25: #{_dqn_forward_impl.1} parent=1 // pred_fallthru
      _
    // Predicated region
    $region26: #{_dqn_forward_impl.1} parent=1 // pred_check
      _
    $region27: #{_dqn_forward_impl.1} parent=1 // pred_check_branch
      %67 = sbr.rel (0) target = $region29
    $region28: #{_dqn_forward_impl.1} parent=1 // pred_region
      _
    $region29: #{_dqn_forward_impl.1} parent=1 // pred_fallthru
      _
    // Predicated region
    $region30: #{_dqn_forward_impl.1} parent=1 // pred_check
      _
    $region31: #{_dqn_forward_impl.1} parent=1 // pred_check_branch
      %69 = sbr.rel (0) target = $region33
    $region32: #{_dqn_forward_impl.1} parent=1 // pred_region
      %s71 = ssub.s32 1024, 1024
      %72 = vsyncadd [#allocation9], %s71
      %s73 = sshll.u32 [#allocation10], 4
      %s74 = int_to_ptr.vmem [resolvable:$true] %s73
      %79 = dma.hbm_to_vmem [thread:$0]  %s7, 1024, %s74, [#allocation9], 64, 64, 4
    $region33: #{_dqn_forward_impl.1} parent=1 // pred_fallthru
      _
    // Predicated region
    $region34: #{_dqn_forward_impl.1} parent=1 // pred_check
      _
    $region35: #{_dqn_forward_impl.1} parent=1 // pred_check_branch
      %81 = sbr.rel (0) target = $region37
    $region36: #{_dqn_forward_impl.1} parent=1 // pred_region
      _
    $region37: #{_dqn_forward_impl.1} parent=1 // pred_fallthru
      _
    // Predicated region
    $region38: #{_dqn_forward_impl.1} parent=1 // pred_check
      _
    $region39: #{_dqn_forward_impl.1} parent=1 // pred_check_branch
      %83 = sbr.rel (0) target = $region41
    $region40: #{_dqn_forward_impl.1} parent=1 // pred_region
      %84 = dma.done [#allocation3], 64
    $region41: #{_dqn_forward_impl.1} parent=1 // pred_fallthru
      _
    // Predicated region
    $region42: #{_dqn_forward_impl.1} parent=1 // pred_check
      _
    $region43: #{_dqn_forward_impl.1} parent=1 // pred_check_branch
      %86 = sbr.rel (0) target = $region45
    $region44: #{_dqn_forward_impl.1} parent=1 // pred_region
      %87 = dma.done [#allocation6], 64
    $region45: #{_dqn_forward_impl.1} parent=1 // pred_fallthru
      _
    // Predicated region
    $region46: #{_dqn_forward_impl.1} parent=1 // pred_check
      _
    $region47: #{_dqn_forward_impl.1} parent=1 // pred_check_branch
      %89 = sbr.rel (0) target = $region49
    $region48: #{_dqn_forward_impl.1} parent=1 // pred_region
      %90 = dma.done [#allocation6], 1024
    $region49: #{_dqn_forward_impl.1} parent=1 // pred_fallthru
      _
    // Predicated region
    $region50: #{_dqn_forward_impl.1} parent=1 // pred_check
      _
    $region51: #{_dqn_forward_impl.1} parent=1 // pred_check_branch
      %92 = sbr.rel (0) target = $region53
    $region52: #{_dqn_forward_impl.1} parent=1 // pred_region
      %93 = dma.done [#allocation9], 1024
    $region53: #{_dqn_forward_impl.1} parent=1 // pred_fallthru
      _
    // Predicated region
    $region54: #{_dqn_forward_impl.1} parent=1 // pred_check
      _
    $region55: #{_dqn_forward_impl.1} parent=1 // pred_check_branch
      %95 = sbr.rel (0) target = $region57
    $region56: #{_dqn_forward_impl.1} parent=1 // pred_region
      %96 = dma.done [#allocation9], 1024
    $region57: #{_dqn_forward_impl.1} parent=1 // pred_fallthru
      _
    %v98 = vld [vmem:[#allocation2] sm:$0xf]
    %v99 = vpack.c.bf16 %v98, %v98
    %v100 = vld [vmem:[#allocation5] sm:$0xf]
    %v101 = vld [vmem:[%s2] sm:$0x1]
    %v103 = vlaneseq
    %v104 = vshrl.u32 %v103, 7
    %v105 = vsub.s32 0, %v104
    %v106 = vrot.slane %v101, %v105
    %vm108 = vcmask 64512
    %v110 = vsel %vm108, %v99, 0
    %vm112 = vcmask 1043456
    %v114 = vsel %vm112, %v100, 0
    %116 = vmatprep.subr.bf16.mxu0 0
    %117 = vmatpush1.bf16.msra.mxu0 %v114
    %118 = vmatprep.subr.bf16.mxu0 0
    %119 = vmatpush1.bf16.msra.mxu0 0
    %120 = vmatprep.subr.bf16.mxu0 0
    %121 = vmatpush1.bf16.msra.mxu0 0
    %122 = vmatprep.subr.bf16.mxu0 0
    %123 = vmatpush1.bf16.msra.mxu0 0
    %124 = vmatprep.subr.bf16.mxu0 0
    %125 = vmatpush1.bf16.msra.mxu0 0
    %126 = vmatprep.subr.bf16.mxu0 0
    %127 = vmatpush1.bf16.msra.mxu0 0
    %128 = vmatprep.subr.bf16.mxu0 0
    %129 = vmatpush1.bf16.msra.mxu0 0
    %130 = vmatprep.subr.bf16.mxu0 0
    %131 = vmatpush1.bf16.msra.mxu0 0
    %132 = vmatprep.subr.bf16.mxu0 0
    %133 = vmatpush1.bf16.msra.mxu0 0
    %134 = vmatprep.subr.bf16.mxu0 0
    %135 = vmatpush1.bf16.msra.mxu0 0
    %136 = vmatprep.subr.bf16.mxu0 0
    %137 = vmatpush1.bf16.msra.mxu0 0
    %138 = vmatprep.subr.bf16.mxu0 0
    %139 = vmatpush1.bf16.msra.mxu0 0
    %140 = vmatprep.subr.bf16.mxu0 0
    %141 = vmatpush1.bf16.msra.mxu0 0
    %142 = vmatprep.subr.bf16.mxu0 0
    %143 = vmatpush1.bf16.msra.mxu0 0
    %144 = vmatprep.subr.bf16.mxu0 0
    %145 = vmatpush1.bf16.msra.mxu0 0
    %146 = vmatprep.subr.bf16.mxu0 0
    %147 = vmatpush1.bf16.msra.mxu0 0
    %148 = vmatprep.mubr.bf16.mxu0 0
    %149 = vmatmul.mubr.bf16.gmra.mrb[0].mxu0 %v110
    %v150 = vpop.f32.mrb[0].mxu0
    %v151 = vadd.f32 %v106, %v150
    %v152 = vpop.f32.mrb[0].mxu0
    %v153 = vpop.f32.mrb[0].mxu0
    %v154 = vpop.f32.mrb[0].mxu0
    %155 = vdwg.mxu0
    %v156 = vmax.f32 %v151, 0.0
    %v157 = vpack.c.bf16 %v156, %v156
    %v158 = vld [vmem:[#allocation7] sm:$0xf]
    %v159 = vld [vmem:[#allocation7 + $0x4] sm:$0xf]
    %v160 = vld [vmem:[#allocation7 + $0x8] sm:$0xf]
    %v161 = vld [vmem:[#allocation7 + $0xc] sm:$0xf]
    %v162 = vld [vmem:[#allocation7 + $0x10] sm:$0xf]
    %v163 = vld [vmem:[#allocation7 + $0x14] sm:$0xf]
    %v164 = vld [vmem:[#allocation7 + $0x18] sm:$0xf]
    %v165 = vld [vmem:[#allocation7 + $0x1c] sm:$0xf]
    %v166 = vld [vmem:[#allocation7 + $0x20] sm:$0xf]
    %v167 = vld [vmem:[#allocation7 + $0x24] sm:$0xf]
    %v168 = vld [vmem:[#allocation7 + $0x28] sm:$0xf]
    %v169 = vld [vmem:[#allocation7 + $0x2c] sm:$0xf]
    %v170 = vld [vmem:[#allocation7 + $0x30] sm:$0xf]
    %v171 = vld [vmem:[#allocation7 + $0x34] sm:$0xf]
    %v172 = vld [vmem:[#allocation7 + $0x38] sm:$0xf]
    %v173 = vld [vmem:[#allocation7 + $0x3c] sm:$0xf]
    %v174 = vld [vmem:[%s4] sm:$0x1]
    %v176 = vlaneseq
    %v177 = vshrl.u32 %v176, 7
    %v178 = vsub.s32 0, %v177
    %v179 = vrot.slane %v174, %v178
    %v197 = vunpack.c.l.b16 %v158
    %v198 = vunpack.c.l.b16 %v159
    %v199 = vunpack.c.l.b16 %v160
    %v200 = vunpack.c.l.b16 %v161
    %v201 = vunpack.c.l.b16 %v162
    %v202 = vunpack.c.l.b16 %v163
    %v203 = vunpack.c.l.b16 %v164
    %v204 = vunpack.c.l.b16 %v165
    %v205 = vunpack.c.l.b16 %v166
    %v206 = vunpack.c.l.b16 %v167
    %v207 = vunpack.c.l.b16 %v168
    %v208 = vunpack.c.l.b16 %v169
    %v209 = vunpack.c.l.b16 %v170
    %v210 = vunpack.c.l.b16 %v171
    %v211 = vunpack.c.l.b16 %v172
    %v212 = vunpack.c.l.b16 %v173
    %v213 = vpack.c.b16 %v198, %v197
    %v214 = vpack.c.b16 %v200, %v199
    %v215 = vpack.c.b16 %v202, %v201
    %v216 = vpack.c.b16 %v204, %v203
    %v217 = vpack.c.b16 %v206, %v205
    %v218 = vpack.c.b16 %v208, %v207
    %v219 = vpack.c.b16 %v210, %v209
    %v220 = vpack.c.b16 %v212, %v211
    %229 = vmatprep.subr.bf16.mxu0 0
    %230 = vmatpush1.bf16.msra.mxu0 %v213
    %231 = vmatprep.subr.bf16.mxu0 0
    %232 = vmatpush1.bf16.msra.mxu0 %v214
    %233 = vmatprep.subr.bf16.mxu0 0
    %234 = vmatpush1.bf16.msra.mxu0 %v215
    %235 = vmatprep.subr.bf16.mxu0 0
    %236 = vmatpush1.bf16.msra.mxu0 %v216
    %237 = vmatprep.subr.bf16.mxu0 0
    %238 = vmatpush1.bf16.msra.mxu0 %v217
    %239 = vmatprep.subr.bf16.mxu0 0
    %240 = vmatpush1.bf16.msra.mxu0 %v218
    %241 = vmatprep.subr.bf16.mxu0 0
    %242 = vmatpush1.bf16.msra.mxu0 %v219
    %243 = vmatprep.subr.bf16.mxu0 0
    %244 = vmatpush1.bf16.msra.mxu0 %v220
    %245 = vmatprep.subr.bf16.mxu0 0
    %246 = vmatpush1.bf16.msra.mxu0 0
    %247 = vmatprep.subr.bf16.mxu0 0
    %248 = vmatpush1.bf16.msra.mxu0 0
    %249 = vmatprep.subr.bf16.mxu0 0
    %250 = vmatpush1.bf16.msra.mxu0 0
    %251 = vmatprep.subr.bf16.mxu0 0
    %252 = vmatpush1.bf16.msra.mxu0 0
    %253 = vmatprep.subr.bf16.mxu0 0
    %254 = vmatpush1.bf16.msra.mxu0 0
    %255 = vmatprep.subr.bf16.mxu0 0
    %256 = vmatpush1.bf16.msra.mxu0 0
    %257 = vmatprep.subr.bf16.mxu0 0
    %258 = vmatpush1.bf16.msra.mxu0 0
    %259 = vmatprep.subr.bf16.mxu0 0
    %260 = vmatpush1.bf16.msra.mxu0 0
    %261 = vmatprep.mubr.bf16.mxu0 0
    %262 = vmatmul.mubr.bf16.gmra.mrb[0].mxu0 %v157
    %v263 = vpop.f32.mrb[0].mxu0
    %v264 = vadd.f32 %v179, %v263
    %v265 = vpop.f32.mrb[0].mxu0
    %v266 = vpop.f32.mrb[0].mxu0
    %v267 = vpop.f32.mrb[0].mxu0
    %268 = vdwg.mxu0
    %v269 = vmax.f32 %v264, 0.0
    %v270 = vpack.c.bf16 %v269, %v269
    %v271 = vld [vmem:[#allocation8] sm:$0xf]
    %v272 = vld [vmem:[#allocation8 + $0x4] sm:$0xf]
    %v273 = vld [vmem:[#allocation8 + $0x8] sm:$0xf]
    %v274 = vld [vmem:[#allocation8 + $0xc] sm:$0xf]
    %v275 = vld [vmem:[#allocation8 + $0x10] sm:$0xf]
    %v276 = vld [vmem:[#allocation8 + $0x14] sm:$0xf]
    %v277 = vld [vmem:[#allocation8 + $0x18] sm:$0xf]
    %v278 = vld [vmem:[#allocation8 + $0x1c] sm:$0xf]
    %v279 = vld [vmem:[#allocation8 + $0x20] sm:$0xf]
    %v280 = vld [vmem:[#allocation8 + $0x24] sm:$0xf]
    %v281 = vld [vmem:[#allocation8 + $0x28] sm:$0xf]
    %v282 = vld [vmem:[#allocation8 + $0x2c] sm:$0xf]
    %v283 = vld [vmem:[#allocation8 + $0x30] sm:$0xf]
    %v284 = vld [vmem:[#allocation8 + $0x34] sm:$0xf]
    %v285 = vld [vmem:[#allocation8 + $0x38] sm:$0xf]
    %v286 = vld [vmem:[#allocation8 + $0x3c] sm:$0xf]
    %v287 = vld [vmem:[%s6] sm:$0x1]
    %v289 = vlaneseq
    %v290 = vshrl.u32 %v289, 7
    %v291 = vsub.s32 0, %v290
    %v292 = vrot.slane %v287, %v291
    %v310 = vunpack.c.l.b16 %v271
    %v311 = vunpack.c.l.b16 %v272
    %v312 = vunpack.c.l.b16 %v273
    %v313 = vunpack.c.l.b16 %v274
    %v314 = vunpack.c.l.b16 %v275
    %v315 = vunpack.c.l.b16 %v276
    %v316 = vunpack.c.l.b16 %v277
    %v317 = vunpack.c.l.b16 %v278
    %v318 = vunpack.c.l.b16 %v279
    %v319 = vunpack.c.l.b16 %v280
    %v320 = vunpack.c.l.b16 %v281
    %v321 = vunpack.c.l.b16 %v282
    %v322 = vunpack.c.l.b16 %v283
    %v323 = vunpack.c.l.b16 %v284
    %v324 = vunpack.c.l.b16 %v285
    %v325 = vunpack.c.l.b16 %v286
    %v326 = vpack.c.b16 %v311, %v310
    %v327 = vpack.c.b16 %v313, %v312
    %v328 = vpack.c.b16 %v315, %v314
    %v329 = vpack.c.b16 %v317, %v316
    %v330 = vpack.c.b16 %v319, %v318
    %v331 = vpack.c.b16 %v321, %v320
    %v332 = vpack.c.b16 %v323, %v322
    %v333 = vpack.c.b16 %v325, %v324
    %342 = vmatprep.subr.bf16.mxu0 0
    %343 = vmatpush1.bf16.msra.mxu0 %v326
    %344 = vmatprep.subr.bf16.mxu0 0
    %345 = vmatpush1.bf16.msra.mxu0 %v327
    %346 = vmatprep.subr.bf16.mxu0 0
    %347 = vmatpush1.bf16.msra.mxu0 %v328
    %348 = vmatprep.subr.bf16.mxu0 0
    %349 = vmatpush1.bf16.msra.mxu0 %v329
    %350 = vmatprep.subr.bf16.mxu0 0
    %351 = vmatpush1.bf16.msra.mxu0 %v330
    %352 = vmatprep.subr.bf16.mxu0 0
    %353 = vmatpush1.bf16.msra.mxu0 %v331
    %354 = vmatprep.subr.bf16.mxu0 0
    %355 = vmatpush1.bf16.msra.mxu0 %v332
    %356 = vmatprep.subr.bf16.mxu0 0
    %357 = vmatpush1.bf16.msra.mxu0 %v333
    %358 = vmatprep.subr.bf16.mxu0 0
    %359 = vmatpush1.bf16.msra.mxu0 0
    %360 = vmatprep.subr.bf16.mxu0 0
    %361 = vmatpush1.bf16.msra.mxu0 0
    %362 = vmatprep.subr.bf16.mxu0 0
    %363 = vmatpush1.bf16.msra.mxu0 0
    %364 = vmatprep.subr.bf16.mxu0 0
    %365 = vmatpush1.bf16.msra.mxu0 0
    %366 = vmatprep.subr.bf16.mxu0 0
    %367 = vmatpush1.bf16.msra.mxu0 0
    %368 = vmatprep.subr.bf16.mxu0 0
    %369 = vmatpush1.bf16.msra.mxu0 0
    %370 = vmatprep.subr.bf16.mxu0 0
    %371 = vmatpush1.bf16.msra.mxu0 0
    %372 = vmatprep.subr.bf16.mxu0 0
    %373 = vmatpush1.bf16.msra.mxu0 0
    %374 = vmatprep.mubr.bf16.mxu0 0
    %375 = vmatmul.mubr.bf16.gmra.mrb[0].mxu0 %v270
    %v376 = vpop.f32.mrb[0].mxu0
    %v377 = vadd.f32 %v292, %v376
    %v378 = vpop.f32.mrb[0].mxu0
    %v379 = vpop.f32.mrb[0].mxu0
    %v380 = vpop.f32.mrb[0].mxu0
    %381 = vdwg.mxu0
    %v382 = vmax.f32 %v377, 0.0
    %v383 = vpack.c.bf16 %v382, %v382
    %v384 = vld [vmem:[#allocation10] sm:$0xf]
    %v385 = vld [vmem:[#allocation10 + $0x4] sm:$0xf]
    %v386 = vld [vmem:[#allocation10 + $0x8] sm:$0xf]
    %v387 = vld [vmem:[#allocation10 + $0xc] sm:$0xf]
    %v388 = vld [vmem:[#allocation10 + $0x10] sm:$0xf]
    %v389 = vld [vmem:[#allocation10 + $0x14] sm:$0xf]
    %v390 = vld [vmem:[#allocation10 + $0x18] sm:$0xf]
    %v391 = vld [vmem:[#allocation10 + $0x1c] sm:$0xf]
    %v392 = vld [vmem:[#allocation10 + $0x20] sm:$0xf]
    %v393 = vld [vmem:[#allocation10 + $0x24] sm:$0xf]
    %v394 = vld [vmem:[#allocation10 + $0x28] sm:$0xf]
    %v395 = vld [vmem:[#allocation10 + $0x2c] sm:$0xf]
    %v396 = vld [vmem:[#allocation10 + $0x30] sm:$0xf]
    %v397 = vld [vmem:[#allocation10 + $0x34] sm:$0xf]
    %v398 = vld [vmem:[#allocation10 + $0x38] sm:$0xf]
    %v399 = vld [vmem:[#allocation10 + $0x3c] sm:$0xf]
    %v400 = vld [vmem:[%s8] sm:$0x1]
    %v402 = vlaneseq
    %v403 = vshrl.u32 %v402, 7
    %v404 = vsub.s32 0, %v403
    %v405 = vrot.slane %v400, %v404
    %v423 = vunpack.c.l.b16 %v384
    %v424 = vunpack.c.l.b16 %v385
    %v425 = vunpack.c.l.b16 %v386
    %v426 = vunpack.c.l.b16 %v387
    %v427 = vunpack.c.l.b16 %v388
    %v428 = vunpack.c.l.b16 %v389
    %v429 = vunpack.c.l.b16 %v390
    %v430 = vunpack.c.l.b16 %v391
    %v431 = vunpack.c.l.b16 %v392
    %v432 = vunpack.c.l.b16 %v393
    %v433 = vunpack.c.l.b16 %v394
    %v434 = vunpack.c.l.b16 %v395
    %v435 = vunpack.c.l.b16 %v396
    %v436 = vunpack.c.l.b16 %v397
    %v437 = vunpack.c.l.b16 %v398
    %v438 = vunpack.c.l.b16 %v399
    %v439 = vpack.c.b16 %v424, %v423
    %v440 = vpack.c.b16 %v426, %v425
    %v441 = vpack.c.b16 %v428, %v427
    %v442 = vpack.c.b16 %v430, %v429
    %v443 = vpack.c.b16 %v432, %v431
    %v444 = vpack.c.b16 %v434, %v433
    %v445 = vpack.c.b16 %v436, %v435
    %v446 = vpack.c.b16 %v438, %v437
    %455 = vmatprep.subr.bf16.mxu0 0
    %456 = vmatpush1.bf16.msra.mxu0 %v439
    %457 = vmatprep.subr.bf16.mxu0 0
    %458 = vmatpush1.bf16.msra.mxu0 %v440
    %459 = vmatprep.subr.bf16.mxu0 0
    %460 = vmatpush1.bf16.msra.mxu0 %v441
    %461 = vmatprep.subr.bf16.mxu0 0
    %462 = vmatpush1.bf16.msra.mxu0 %v442
    %463 = vmatprep.subr.bf16.mxu0 0
    %464 = vmatpush1.bf16.msra.mxu0 %v443
    %465 = vmatprep.subr.bf16.mxu0 0
    %466 = vmatpush1.bf16.msra.mxu0 %v444
    %467 = vmatprep.subr.bf16.mxu0 0
    %468 = vmatpush1.bf16.msra.mxu0 %v445
    %469 = vmatprep.subr.bf16.mxu0 0
    %470 = vmatpush1.bf16.msra.mxu0 %v446
    %471 = vmatprep.subr.bf16.mxu0 0
    %472 = vmatpush1.bf16.msra.mxu0 0
    %473 = vmatprep.subr.bf16.mxu0 0
    %474 = vmatpush1.bf16.msra.mxu0 0
    %475 = vmatprep.subr.bf16.mxu0 0
    %476 = vmatpush1.bf16.msra.mxu0 0
    %477 = vmatprep.subr.bf16.mxu0 0
    %478 = vmatpush1.bf16.msra.mxu0 0
    %479 = vmatprep.subr.bf16.mxu0 0
    %480 = vmatpush1.bf16.msra.mxu0 0
    %481 = vmatprep.subr.bf16.mxu0 0
    %482 = vmatpush1.bf16.msra.mxu0 0
    %483 = vmatprep.subr.bf16.mxu0 0
    %484 = vmatpush1.bf16.msra.mxu0 0
    %485 = vmatprep.subr.bf16.mxu0 0
    %486 = vmatpush1.bf16.msra.mxu0 0
    %487 = vmatprep.mubr.bf16.mxu0 0
    %488 = vmatmul.mubr.bf16.gmra.mrb[0].mxu0 %v383
    %v489 = vpop.f32.mrb[0].mxu0
    %v490 = vadd.f32 %v405, %v489
    %v491 = vpop.f32.mrb[0].mxu0
    %v492 = vpop.f32.mrb[0].mxu0
    %v493 = vpop.f32.mrb[0].mxu0
    %494 = vdwg.mxu0
    %495 = vst [vmem:[#allocation11] sm:$0xf] %v490
    // Predicated region
    $region58: #{_dqn_forward_impl.1} parent=1 // pred_check
      _
    $region59: #{_dqn_forward_impl.1} parent=1 // pred_check_branch
      %497 = sbr.rel (0) target = $region61
    $region60: #{_dqn_forward_impl.1} parent=1 // pred_region
      %s499 = ssub.s32 64, 64
      %500 = vsyncadd [#allocation4], %s499
      %s502 = sshll.u32 [#allocation11], 4
      %s503 = int_to_ptr.vmem [resolvable:$true] %s502
      %505 = dma.vmem_to_hbm [thread:$0]  %s503, 64, %s9, [#allocation4]
    $region61: #{_dqn_forward_impl.1} parent=1 // pred_fallthru
      _
    // Predicated region
    $region62: #{_dqn_forward_impl.1} parent=1 // pred_check
      _
    $region63: #{_dqn_forward_impl.1} parent=1 // pred_check_branch
      %507 = sbr.rel (0) target = $region65
    $region64: #{_dqn_forward_impl.1} parent=1 // pred_region
      %508 = dma.done [#allocation4], 64
    $region65: #{_dqn_forward_impl.1} parent=1 // pred_fallthru
      _
    %509 = vsyncpa [#allocation3], 1
    %510 = vsyncpa [#allocation6], 1
    %511 = vsyncpa [#allocation9], 1
    %512 = vsyncpa [#allocation4], 1

</llo_original>
